<compile_context>
chip_gen: v5e
topology: v5e:2x2
jax: 0.10.0
libtpu: 0.0.40
codegen_flags: <defaults>
</compile_context>

<pallas_src>
import jax
import jax.numpy as jnp
from jax.experimental import pallas as pl
from jax.experimental.pallas import tpu as pltpu

_LANES = 128                  # original x-rows packed per lane-dense row
_FEATS = 4                    # input features
_PACK = _LANES * _FEATS       # 512: lane-dense input row width
_MAX_TILE_ROWS = 512          # packed rows per tile -> 65536 x-rows, ~1 MiB in
_MIN_PALLAS_ROWS = 512        # below this, plain jnp beats pallas_call overhead


def _mydense_kernel(x_ref, s_ref, o_ref):
    # One lane-dense MXU contraction per tile:
    #   x_ref: (TR, 512)  -- 128 original rows x 4 features per packed row
    #   s_ref: (512, 128) -- block-diagonal kron(I_128, w_folded), resident
    #   o_ref: (TR, 128)  -- 128 original outputs per packed row
    o_ref[...] = jnp.dot(
        x_ref[...], s_ref[...], preferred_element_type=jnp.float32
    ).astype(o_ref.dtype)


def mydense_forward(x, w0, w1, w2, w3):
    n, d = x.shape
    assert d == _FEATS and w0.shape == (4, 4) and w1.shape == (4, 4)
    assert w2.shape == (4, 4) and w3.shape == (4, 1)

    # Fold the weight chain once (three tiny matmuls) -> (4, 1).
    hp = jax.lax.Precision.HIGHEST
    w = jnp.dot(jnp.dot(jnp.dot(w0, w1, precision=hp), w2, precision=hp),
                w3, precision=hp)

    if n < _MIN_PALLAS_ROWS:
        # Tiny batch: pallas_call fixed overhead dwarfs a (n,4)@(4,1) matmul.
        return jnp.dot(x, w, precision=hp)

    # Pad N so the lane-dense packing and the row tiling divide evenly
    # (never rely on implicit edge-block behavior).
    r = pl.cdiv(n, _LANES)
    tile_rows = min(_MAX_TILE_ROWS, r)
    grid_rows = pl.cdiv(r, tile_rows)
    r_pad = grid_rows * tile_rows
    n_pad = r_pad * _LANES
    x_p = x if n_pad == n else jnp.pad(x, ((0, n_pad - n), (0, 0)))

    # Contiguous (free) reshape to a lane-dense layout: packed row k holds
    # original rows [128k, 128k+128), feature-minor.
    x2 = x_p.reshape(r_pad, _PACK)

    # S[4*i + j, i] = w[j]  =>  (x2 @ S)[k, c] == (x_p @ w)[128*k + c].
    s = jnp.kron(jnp.eye(_LANES, dtype=x.dtype), w.astype(x.dtype))  # (512,128)

    bytes_accessed = n_pad * _FEATS * 4 + _PACK * _LANES * 4 + n_pad * 4
    out2 = pl.pallas_call(
        _mydense_kernel,
        out_shape=jax.ShapeDtypeStruct((r_pad, _LANES), x.dtype),
        grid=(grid_rows,),
        in_specs=[
            pl.BlockSpec((tile_rows, _PACK), lambda i: (i, 0)),
            pl.BlockSpec((_PACK, _LANES), lambda i: (0, 0)),  # weights resident
        ],
        out_specs=pl.BlockSpec((tile_rows, _LANES), lambda i: (i, 0)),
        compiler_params=pltpu.CompilerParams(
            dimension_semantics=("parallel",),      # v7x: shard rows across TCs
            vmem_limit_bytes=32 * 1024 * 1024,
        ),
        cost_estimate=pl.CostEstimate(
            flops=2 * r_pad * _PACK * _LANES,
            transcendentals=0,
            bytes_accessed=bytes_accessed,
        ),
    )(x2, s)

    # Free contiguous reshape back to (N, 1); drop the padding rows.
    return out2.reshape(n_pad, 1)[:n]


if __name__ == "__main__":
    key = jax.random.PRNGKey(0)
    kx, k0, k1, k2, k3 = jax.random.split(key, 5)

    # Deterministic "torch.randn"-style params.
    w0 = jax.random.normal(k0, (4, 4), dtype=jnp.float32)
    w1 = jax.random.normal(k1, (4, 4), dtype=jnp.float32)
    w2 = jax.random.normal(k2, (4, 4), dtype=jnp.float32)
    w3 = jax.random.normal(k3, (4, 1), dtype=jnp.float32)

    # Batch large enough to exercise the Pallas path (still small: 32 KiB).
    n = 2048
    x = jax.random.normal(kx, (n, 4), dtype=jnp.float32)

    out = jax.block_until_ready(mydense_forward(x, w0, w1, w2, w3))

    # Pure-JAX reference of the un-folded chained matmul.
    hp = jax.lax.Precision.HIGHEST
    ref = x
    for wi in (w0, w1, w2, w3):
        ref = jnp.dot(ref, wi, precision=hp)

    assert out.shape == (n, 1)
    assert jnp.allclose(out, ref, atol=1e-3, rtol=1e-3)

    # Tiny-batch fast path (plain jnp, no pallas_call overhead).
    out_small = jax.block_until_ready(mydense_forward(x[:2], w0, w1, w2, w3))
    assert out_small.shape == (2, 1)
    assert jnp.allclose(out_small, ref[:2], atol=1e-3, rtol=1e-3)

    print("KERNEL_OK")
</pallas_src>

<mosaic_0001>
module attributes {stable_mosaic.version = 11 : i64} {
  func.func @_mydense_kernel(%arg0: i32, %arg1: memref<16x512xf32, #tpu.memory_space<vmem>>, %arg2: memref<512x128xf32, #tpu.memory_space<vmem>>, %arg3: memref<16x128xf32, #tpu.memory_space<vmem>>) attributes {dimension_semantics = [#tpu.dimension_semantics<parallel>], iteration_bounds = array<i64: 1>, scalar_prefetch = 0 : i64, scratch_operands = 0 : i64, tpu.core_type = #tpu.core_type<tc>, window_params = [{transform_indices = @transform_0, window_bounds = array<i64: 16, 512>}, {pipeline_mode = #tpu.pipeline_mode<synchronous>, transform_indices = @transform_1, window_bounds = array<i64: 512, 128>}, {transform_indices = @transform_2, window_bounds = array<i64: 16, 128>}]} {
    %c0 = arith.constant 0 : index
    %c0_0 = arith.constant 0 : index
    %0 = vector.load %arg1[%c0, %c0_0] : memref<16x512xf32, #tpu.memory_space<vmem>>, vector<16x512xf32>
    %c0_1 = arith.constant 0 : index
    %c0_2 = arith.constant 0 : index
    %1 = vector.load %arg2[%c0_1, %c0_2] : memref<512x128xf32, #tpu.memory_space<vmem>>, vector<512x128xf32>
    %cst = arith.constant dense<0.000000e+00> : vector<16x128xf32>
    %2 = tpu.matmul %0, %1, %cst {dimension_numbers = #tpu.dot_dimension_numbers<[1], [0], [0], [1], [0, 0, 1, 1], [], []>} : vector<16x512xf32>, vector<512x128xf32>, vector<16x128xf32> -> vector<16x128xf32>
    %c0_3 = arith.constant 0 : index
    %c0_4 = arith.constant 0 : index
    %3 = vector.load %arg3[%c0_3, %c0_4] : memref<16x128xf32, #tpu.memory_space<vmem>>, vector<16x128xf32>
    tpu.vector_store %arg3[%c0_3, %c0_4], %2 {strides = array<i32>} : memref<16x128xf32, #tpu.memory_space<vmem>>, vector<16x128xf32>,
    return
  }
  func.func @transform_0(%arg0: i32) -> (i32, i32) {
    %c0_i32 = arith.constant 0 : i32
    %c0_i32_0 = arith.constant 0 : i32
    return %arg0, %c0_i32 : i32, i32
  }
  func.func @transform_1(%arg0: i32) -> (i32, i32) {
    %c0_i32 = arith.constant 0 : i32
    %c0_i32_0 = arith.constant 0 : i32
    %c0_i32_1 = arith.constant 0 : i32
    return %c0_i32, %c0_i32_0 : i32, i32
  }
  func.func @transform_2(%arg0: i32) -> (i32, i32) {
    %c0_i32 = arith.constant 0 : i32
    %c0_i32_0 = arith.constant 0 : i32
    return %arg0, %c0_i32 : i32, i32
  }
}

</mosaic_0001>

<llo_original>
// kernel: tpu_custom_call.1
$region0: #{tpu_custom_call.1}
  #allocation0 [shape = 'u32[]', space=smem, size = 0x4, offset = 0x4, fixed_abs, tag = 'smem constant byte address 0x4 - core index']
  #allocation1 [shape = 'u32[72,128]{1,0:T(1,128)}', space=vmem, size = 0x9000, scoped, tag = 'internal scratch']
  %s0 = inlined_call_operand.hbm [shape: f32[16,512], index: 0, kind: input, shape index: {}]
  %s1 = inlined_call_operand.hbm [shape: f32[512,128], index: 1, kind: input, shape index: {}]
  %s2 = inlined_call_operand.hbm [shape: f32[16,128], index: 2, kind: output, shape index: {}]
  %s3 = sld [smem:[#allocation0]]
  $region26: #{tpu_custom_call.1} parent=0
    _
  %s5 = ssub.s32 1, %s3
  %s6 = scalar_select 0, %s5, %s3
  $region1: #{tpu_custom_call.1} parent=0
    #allocation2 [shape = 'u8[32768]{0}', space=vmem, size = 0x8000, scoped, tag = 'input window, operand 0, single buffered']
    #allocation3 [shape = 's32[1]{0}', space=sflag, size = 0x4, scoped, tag = 'scoped memory for tpu_custom_call.1']
    #allocation4 [shape = 's32[1]{0}', space=sflag, size = 0x4, scoped, tag = 'scoped memory for tpu_custom_call.1']
    #allocation5 [shape = 'u8[262144]{0}', space=vmem, size = 0x40000, scoped, tag = 'input window, operand 1, single buffered']
    #allocation6 [shape = 's32[1]{0}', space=sflag, size = 0x4, scoped, tag = 'scoped memory for tpu_custom_call.1']
    #allocation7 [shape = 'u8[8192]{0}', space=vmem, size = 0x2000, scoped, tag = 'output window, operand 0, single buffered']
    %7 = vsyncpa [#allocation3], 0
    %8 = vsyncpa [#allocation6], 0
    %9 = vsyncpa [#allocation4], 0
    // Predicated region
    $region2: #{tpu_custom_call.1} parent=1 // pred_check
      _
    $region3: #{tpu_custom_call.1} parent=1 // pred_check_branch
      %11 = sbr.rel (0) target = $region5
    $region4: #{tpu_custom_call.1} parent=1 // pred_region
      %13 = vsyncadd [#allocation3], 0
      %s14 = sshll.u32 %s0, 4
      %s15 = int_to_ptr.hbm [resolvable:$true] %s14
      %s16 = sshll.u32 [#allocation2], 4
      %s17 = int_to_ptr.vmem [resolvable:$true] %s16
      %22 = dma.hbm_to_vmem [thread:$0]  %s15, 1024, %s17, [#allocation3], 512, 512, 32
    $region5: #{tpu_custom_call.1} parent=1 // pred_fallthru
      _
    // Predicated region
    $region6: #{tpu_custom_call.1} parent=1 // pred_check
      _
    $region7: #{tpu_custom_call.1} parent=1 // pred_check_branch
      %24 = sbr.rel (0) target = $region9
    $region8: #{tpu_custom_call.1} parent=1 // pred_region
      %26 = vsyncadd [#allocation6], 0
      %s27 = sshll.u32 %s1, 4
      %s28 = int_to_ptr.hbm [resolvable:$true] %s27
      %s29 = sshll.u32 [#allocation5], 4
      %s30 = int_to_ptr.vmem [resolvable:$true] %s29
      %35 = dma.hbm_to_vmem [thread:$0]  %s28, 8192, %s30, [#allocation6], 128, 128, 8
    $region9: #{tpu_custom_call.1} parent=1 // pred_fallthru
      _
    // Predicated region
    $region10: #{tpu_custom_call.1} parent=1 // pred_check
      _
    $region11: #{tpu_custom_call.1} parent=1 // pred_check_branch
      %37 = sbr.rel (0) target = $region13
    $region12: #{tpu_custom_call.1} parent=1 // pred_region
      %39 = dma.done [#allocation3], 1024
    $region13: #{tpu_custom_call.1} parent=1 // pred_fallthru
      _
    // Predicated region
    $region14: #{tpu_custom_call.1} parent=1 // pred_check
      _
    $region15: #{tpu_custom_call.1} parent=1 // pred_check_branch
      %41 = sbr.rel (0) target = $region17
    $region16: #{tpu_custom_call.1} parent=1 // pred_region
      %43 = dma.done [#allocation6], 8192
    $region17: #{tpu_custom_call.1} parent=1 // pred_fallthru
      _
    %v44 = vld [vmem:[#allocation2] sm:$0xff]
    %v45 = vld [vmem:[#allocation2 + $0x8] sm:$0xff]
    %v46 = vld [vmem:[#allocation2 + $0x10] sm:$0xff]
    %v47 = vld [vmem:[#allocation2 + $0x18] sm:$0xff]
    %v48 = vld [vmem:[#allocation2 + $0x20] sm:$0xff]
    %v49 = vld [vmem:[#allocation2 + $0x28] sm:$0xff]
    %v50 = vld [vmem:[#allocation2 + $0x30] sm:$0xff]
    %v51 = vld [vmem:[#allocation2 + $0x38] sm:$0xff]
    %v52 = vld [vmem:[#allocation5] sm:$0xff]
    %v53 = vld [vmem:[#allocation5 + $0x8] sm:$0xff]
    %v54 = vld [vmem:[#allocation5 + $0x10] sm:$0xff]
    %v55 = vld [vmem:[#allocation5 + $0x18] sm:$0xff]
    %v56 = vld [vmem:[#allocation5 + $0x20] sm:$0xff]
    %v57 = vld [vmem:[#allocation5 + $0x28] sm:$0xff]
    %v58 = vld [vmem:[#allocation5 + $0x30] sm:$0xff]
    %v59 = vld [vmem:[#allocation5 + $0x38] sm:$0xff]
    %v60 = vld [vmem:[#allocation5 + $0x40] sm:$0xff]
    %v61 = vld [vmem:[#allocation5 + $0x48] sm:$0xff]
    %v62 = vld [vmem:[#allocation5 + $0x50] sm:$0xff]
    %v63 = vld [vmem:[#allocation5 + $0x58] sm:$0xff]
    %v64 = vld [vmem:[#allocation5 + $0x60] sm:$0xff]
    %v65 = vld [vmem:[#allocation5 + $0x68] sm:$0xff]
    %v66 = vld [vmem:[#allocation5 + $0x70] sm:$0xff]
    %v67 = vld [vmem:[#allocation5 + $0x78] sm:$0xff]
    %v68 = vld [vmem:[#allocation5 + $0x80] sm:$0xff]
    %v69 = vld [vmem:[#allocation5 + $0x88] sm:$0xff]
    %v70 = vld [vmem:[#allocation5 + $0x90] sm:$0xff]
    %v71 = vld [vmem:[#allocation5 + $0x98] sm:$0xff]
    %v72 = vld [vmem:[#allocation5 + $0xa0] sm:$0xff]
    %v73 = vld [vmem:[#allocation5 + $0xa8] sm:$0xff]
    %v74 = vld [vmem:[#allocation5 + $0xb0] sm:$0xff]
    %v75 = vld [vmem:[#allocation5 + $0xb8] sm:$0xff]
    %v76 = vld [vmem:[#allocation5 + $0xc0] sm:$0xff]
    %v77 = vld [vmem:[#allocation5 + $0xc8] sm:$0xff]
    %v78 = vld [vmem:[#allocation5 + $0xd0] sm:$0xff]
    %v79 = vld [vmem:[#allocation5 + $0xd8] sm:$0xff]
    %v80 = vld [vmem:[#allocation5 + $0xe0] sm:$0xff]
    %v81 = vld [vmem:[#allocation5 + $0xe8] sm:$0xff]
    %v82 = vld [vmem:[#allocation5 + $0xf0] sm:$0xff]
    %v83 = vld [vmem:[#allocation5 + $0xf8] sm:$0xff]
    %v84 = vld [vmem:[#allocation5 + $0x100] sm:$0xff]
    %v85 = vld [vmem:[#allocation5 + $0x108] sm:$0xff]
    %v86 = vld [vmem:[#allocation5 + $0x110] sm:$0xff]
    %v87 = vld [vmem:[#allocation5 + $0x118] sm:$0xff]
    %v88 = vld [vmem:[#allocation5 + $0x120] sm:$0xff]
    %v89 = vld [vmem:[#allocation5 + $0x128] sm:$0xff]
    %v90 = vld [vmem:[#allocation5 + $0x130] sm:$0xff]
    %v91 = vld [vmem:[#allocation5 + $0x138] sm:$0xff]
    %v92 = vld [vmem:[#allocation5 + $0x140] sm:$0xff]
    %v93 = vld [vmem:[#allocation5 + $0x148] sm:$0xff]
    %v94 = vld [vmem:[#allocation5 + $0x150] sm:$0xff]
    %v95 = vld [vmem:[#allocation5 + $0x158] sm:$0xff]
    %v96 = vld [vmem:[#allocation5 + $0x160] sm:$0xff]
    %v97 = vld [vmem:[#allocation5 + $0x168] sm:$0xff]
    %v98 = vld [vmem:[#allocation5 + $0x170] sm:$0xff]
    %v99 = vld [vmem:[#allocation5 + $0x178] sm:$0xff]
    %v100 = vld [vmem:[#allocation5 + $0x180] sm:$0xff]
    %v101 = vld [vmem:[#allocation5 + $0x188] sm:$0xff]
    %v102 = vld [vmem:[#allocation5 + $0x190] sm:$0xff]
    %v103 = vld [vmem:[#allocation5 + $0x198] sm:$0xff]
    %v104 = vld [vmem:[#allocation5 + $0x1a0] sm:$0xff]
    %v105 = vld [vmem:[#allocation5 + $0x1a8] sm:$0xff]
    %v106 = vld [vmem:[#allocation5 + $0x1b0] sm:$0xff]
    %v107 = vld [vmem:[#allocation5 + $0x1b8] sm:$0xff]
    %v108 = vld [vmem:[#allocation5 + $0x1c0] sm:$0xff]
    %v109 = vld [vmem:[#allocation5 + $0x1c8] sm:$0xff]
    %v110 = vld [vmem:[#allocation5 + $0x1d0] sm:$0xff]
    %v111 = vld [vmem:[#allocation5 + $0x1d8] sm:$0xff]
    %v112 = vld [vmem:[#allocation5 + $0x1e0] sm:$0xff]
    %v113 = vld [vmem:[#allocation5 + $0x1e8] sm:$0xff]
    %v114 = vld [vmem:[#allocation5 + $0x1f0] sm:$0xff]
    %v115 = vld [vmem:[#allocation5 + $0x1f8] sm:$0xff]
    %116 = vmatpush.msra.mxu0 %v67
    %117 = vmatpush.msra.mxu0 %v66
    %118 = vmatpush.msra.mxu0 %v65
    %119 = vmatpush.msra.mxu0 %v64
    %120 = vmatpush.msra.mxu0 %v63
    %121 = vmatpush.msra.mxu0 %v62
    %122 = vmatpush.msra.mxu0 %v61
    %123 = vmatpush.msra.mxu0 %v60
    %124 = vmatpush.msra.mxu0 %v59
    %125 = vmatpush.msra.mxu0 %v58
    %126 = vmatpush.msra.mxu0 %v57
    %127 = vmatpush.msra.mxu0 %v56
    %128 = vmatpush.msra.mxu0 %v55
    %129 = vmatpush.msra.mxu0 %v54
    %130 = vmatpush.msra.mxu0 %v53
    %131 = vmatpush.msra.mxu0 %v52
    %132 = vmatmul.f32.gmra.mxu0 %v44
    %v133 = vpop.f32.mrf.mxu0
    %v134 = vadd.f32 0.0, %v133
    %135 = vmatmul.f32.gmra.mxu0 %v48
    %v136 = vpop.f32.mrf.mxu0
    %v137 = vadd.f32 0.0, %v136
    %138 = vdwg.mxu0
    %139 = vmatpush.msra.mxu0 %v83
    %140 = vmatpush.msra.mxu0 %v82
    %141 = vmatpush.msra.mxu0 %v81
    %142 = vmatpush.msra.mxu0 %v80
    %143 = vmatpush.msra.mxu0 %v79
    %144 = vmatpush.msra.mxu0 %v78
    %145 = vmatpush.msra.mxu0 %v77
    %146 = vmatpush.msra.mxu0 %v76
    %147 = vmatpush.msra.mxu0 %v75
    %148 = vmatpush.msra.mxu0 %v74
    %149 = vmatpush.msra.mxu0 %v73
    %150 = vmatpush.msra.mxu0 %v72
    %151 = vmatpush.msra.mxu0 %v71
    %152 = vmatpush.msra.mxu0 %v70
    %153 = vmatpush.msra.mxu0 %v69
    %154 = vmatpush.msra.mxu0 %v68
    %155 = vmatmul.f32.gmra.mxu0 %v45
    %v156 = vpop.f32.mrf.mxu0
    %v157 = vadd.f32 %v134, %v156
    %158 = vmatmul.f32.gmra.mxu0 %v49
    %v159 = vpop.f32.mrf.mxu0
    %v160 = vadd.f32 %v137, %v159
    %161 = vdwg.mxu0
    %162 = vmatpush.msra.mxu0 %v99
    %163 = vmatpush.msra.mxu0 %v98
    %164 = vmatpush.msra.mxu0 %v97
    %165 = vmatpush.msra.mxu0 %v96
    %166 = vmatpush.msra.mxu0 %v95
    %167 = vmatpush.msra.mxu0 %v94
    %168 = vmatpush.msra.mxu0 %v93
    %169 = vmatpush.msra.mxu0 %v92
    %170 = vmatpush.msra.mxu0 %v91
    %171 = vmatpush.msra.mxu0 %v90
    %172 = vmatpush.msra.mxu0 %v89
    %173 = vmatpush.msra.mxu0 %v88
    %174 = vmatpush.msra.mxu0 %v87
    %175 = vmatpush.msra.mxu0 %v86
    %176 = vmatpush.msra.mxu0 %v85
    %177 = vmatpush.msra.mxu0 %v84
    %178 = vmatmul.f32.gmra.mxu0 %v46
    %v179 = vpop.f32.mrf.mxu0
    %v180 = vadd.f32 %v157, %v179
    %181 = vmatmul.f32.gmra.mxu0 %v50
    %v182 = vpop.f32.mrf.mxu0
    %v183 = vadd.f32 %v160, %v182
    %184 = vdwg.mxu0
    %185 = vmatpush.msra.mxu0 %v115
    %186 = vmatpush.msra.mxu0 %v114
    %187 = vmatpush.msra.mxu0 %v113
    %188 = vmatpush.msra.mxu0 %v112
    %189 = vmatpush.msra.mxu0 %v111
    %190 = vmatpush.msra.mxu0 %v110
    %191 = vmatpush.msra.mxu0 %v109
    %192 = vmatpush.msra.mxu0 %v108
    %193 = vmatpush.msra.mxu0 %v107
    %194 = vmatpush.msra.mxu0 %v106
    %195 = vmatpush.msra.mxu0 %v105
    %196 = vmatpush.msra.mxu0 %v104
    %197 = vmatpush.msra.mxu0 %v103
    %198 = vmatpush.msra.mxu0 %v102
    %199 = vmatpush.msra.mxu0 %v101
    %200 = vmatpush.msra.mxu0 %v100
    %201 = vmatmul.f32.gmra.mxu0 %v47
    %v202 = vpop.f32.mrf.mxu0
    %v203 = vadd.f32 %v180, %v202
    %204 = vmatmul.f32.gmra.mxu0 %v51
    %v205 = vpop.f32.mrf.mxu0
    %v206 = vadd.f32 %v183, %v205
    %207 = vdwg.mxu0
    %208 = vst [vmem:[#allocation7] sm:$0xff] %v203
    %209 = vst [vmem:[#allocation7 + $0x8] sm:$0xff] %v206
    // Predicated region
    $region18: #{tpu_custom_call.1} parent=1 // pred_check
      _
    $region19: #{tpu_custom_call.1} parent=1 // pred_check_branch
      %211 = sbr.rel (0) target = $region21
    $region20: #{tpu_custom_call.1} parent=1 // pred_region
      %213 = vsyncadd [#allocation4], 0
      %s214 = sshll.u32 [#allocation7], 4
      %s215 = int_to_ptr.vmem [resolvable:$true] %s214
      %s216 = sshll.u32 %s2, 4
      %s217 = int_to_ptr.hbm [resolvable:$true] %s216
      %222 = dma.vmem_to_hbm [thread:$0]  %s215, 256, %s217, [#allocation4], 128, 128, 8
    $region21: #{tpu_custom_call.1} parent=1 // pred_fallthru
      _
    // Predicated region
    $region22: #{tpu_custom_call.1} parent=1 // pred_check
      _
    $region23: #{tpu_custom_call.1} parent=1 // pred_check_branch
      %224 = sbr.rel (0) target = $region25
    $region24: #{tpu_custom_call.1} parent=1 // pred_region
      %226 = dma.done [#allocation4], 256
    $region25: #{tpu_custom_call.1} parent=1 // pred_fallthru
      _
    %227 = vsyncpa [#allocation3], 1
    %228 = vsyncpa [#allocation6], 1
    %229 = vsyncpa [#allocation4], 1

</llo_original>
